<compile_context>
chip_gen: v7x
topology: tpu7x:2x2x1
jax: 0.10.0
libtpu: 0.0.40
codegen_flags: <defaults>
</compile_context>

<pallas_src>
import functools

import jax
import jax.numpy as jnp
from jax.experimental import pallas as pl
from jax.experimental.pallas import tpu as pltpu


# ---------------------------------------------------------------------------
# Fused kernel: [Linear+LoRA+bias] -> ReLU -> [Linear+LoRA+bias]
# ---------------------------------------------------------------------------
def _fused_lora_mlp_kernel(
    x_ref,        # [tm, d_in]            activations, original dtype (f32)
    wa1_ref,      # [d_in, d_hidden+rp]   [W1.T | A1.T]   (compute dtype)
    b1_ref,       # [1, d_hidden]         bias1           (f32)
    bl1_ref,      # [rp, d_hidden]        alpha * B1.T    (compute dtype)
    wa2_ref,      # [d_hidden, d_out+rp]  [W2.T | A2.T]
    b2_ref,       # [1, d_out]
    bl2_ref,      # [rp, d_out]
    o_ref,        # [tm, d_out]
    *,
    d_hidden,
    d_out,
):
    # In-kernel cast: VPU filler hidden under MXU slack (no wrapper HBM copy).
    x = x_ref[...].astype(wa1_ref.dtype)

    # ----- layer 1: single MXU pass yields [h_pre | x@A1], f32 accumulate ---
    y1 = jnp.dot(x, wa1_ref[...], preferred_element_type=jnp.float32)
    h_pre = y1[:, :d_hidden]
    xa1 = y1[:, d_hidden:]
    lora1 = jnp.dot(xa1.astype(bl1_ref.dtype), bl1_ref[...],
                    preferred_element_type=jnp.float32)
    # f32 epilogue (bias + lora add + ReLU); alpha already folded into bl1.
    h = jnp.maximum(h_pre + b1_ref[...] + lora1, 0.0)

    # ----- layer 2 ----------------------------------------------------------
    h_c = h.astype(wa2_ref.dtype)  # no-op in the f32 path
    y2 = jnp.dot(h_c, wa2_ref[...], preferred_element_type=jnp.float32)
    out_pre = y2[:, :d_out]
    ha2 = y2[:, d_out:]
    lora2 = jnp.dot(ha2.astype(bl2_ref.dtype), bl2_ref[...],
                    preferred_element_type=jnp.float32)
    o_ref[...] = (out_pre + b2_ref[...] + lora2).astype(o_ref.dtype)


# ---------------------------------------------------------------------------
# One-time parameter preparation (layout plumbing, done once at "load" time)
# ---------------------------------------------------------------------------
def _prepare_lora_layer(w, b, lora_a, lora_b, alpha, *, compute_dtype):
    out_f, in_f = w.shape
    r = lora_a.shape[0]
    # bf16 packs 16 sublanes/vreg -> pad rank to 16; 8 is enough for f32.
    r_pad_to = 16 if compute_dtype == jnp.bfloat16 else 8
    rp = max(((r + r_pad_to - 1) // r_pad_to) * r_pad_to, r_pad_to)

    wt = jnp.asarray(w, jnp.float32).T                                 # [in, out]
    at = jnp.zeros((in_f, rp), jnp.float32).at[:, :r].set(
        jnp.asarray(lora_a, jnp.float32).T)                            # [in, rp]
    wa = jnp.concatenate([wt, at], axis=1).astype(compute_dtype)       # [in, out+rp]

    # Fold alpha into B in f32 BEFORE any narrow cast (exact, no double round).
    blt = jnp.zeros((rp, out_f), jnp.float32).at[:r, :].set(
        float(alpha) * jnp.asarray(lora_b, jnp.float32).T
    ).astype(compute_dtype)                                            # [rp, out]

    bias = jnp.asarray(b, jnp.float32).reshape(1, out_f)               # f32 epilogue
    return wa, bias, blt, rp


def prepare_model_params(params, alpha, *, compute_dtype=jnp.float32):
    wa1, b1, bl1, rp1 = _prepare_lora_layer(
        params["w1"], params["b1"], params["lora_a1"], params["lora_b1"],
        alpha, compute_dtype=compute_dtype)
    wa2, b2, bl2, rp2 = _prepare_lora_layer(
        params["w2"], params["b2"], params["lora_a2"], params["lora_b2"],
        alpha, compute_dtype=compute_dtype)
    assert rp1 == rp2
    return dict(wa1=wa1, b1=b1, bl1=bl1, wa2=wa2, b2=b2, bl2=bl2, rp=rp1)


# ---------------------------------------------------------------------------
# Forward wrapper: single pallas_call for the whole ModelWithLoRA forward
# ---------------------------------------------------------------------------
def model_with_lora_forward(x, prep, *, tm=128):
    wa1, b1, bl1 = prep["wa1"], prep["b1"], prep["bl1"]
    wa2, b2, bl2 = prep["wa2"], prep["b2"], prep["bl2"]
    rp = prep["rp"]

    d_in = wa1.shape[0]
    d_hidden = wa1.shape[1] - rp
    d_out = wa2.shape[1] - rp

    lead = x.shape[:-1]
    x2 = x.reshape(-1, d_in)           # NOTE: no dtype cast here (done in-kernel)
    m = x2.shape[0]

    # Pick an M tile (multiple of 8 sublanes) and pad M so the grid divides it.
    assert tm % 8 == 0
    m_ceil8 = ((m + 7) // 8) * 8
    tm = min(tm, m_ceil8)
    m_pad = ((m + tm - 1) // tm) * tm
    if m_pad != m:
        x2 = jnp.pad(x2, ((0, m_pad - m), (0, 0)))
    grid_m = m_pad // tm

    kernel = functools.partial(_fused_lora_mlp_kernel,
                               d_hidden=d_hidden, d_out=d_out)

    out = pl.pallas_call(
        kernel,
        out_shape=jax.ShapeDtypeStruct((m_pad, d_out), x.dtype),
        grid=(grid_m,),
        in_specs=[
            pl.BlockSpec((tm, d_in), lambda i: (i, 0)),
            pl.BlockSpec((d_in, d_hidden + rp), lambda i: (0, 0)),
            pl.BlockSpec((1, d_hidden), lambda i: (0, 0)),
            pl.BlockSpec((rp, d_hidden), lambda i: (0, 0)),
            pl.BlockSpec((d_hidden, d_out + rp), lambda i: (0, 0)),
            pl.BlockSpec((1, d_out), lambda i: (0, 0)),
            pl.BlockSpec((rp, d_out), lambda i: (0, 0)),
        ],
        out_specs=pl.BlockSpec((tm, d_out), lambda i: (i, 0)),
        compiler_params=pltpu.CompilerParams(
            # Batch tiles are independent -> shard across v7x's 2 TensorCores.
            dimension_semantics=("parallel",),
            vmem_limit_bytes=32 * 1024 * 1024,
        ),
    )(x2, wa1, b1, bl1, wa2, b2, bl2)

    if m_pad != m:
        out = out[:m]
    return out.reshape(*lead, d_out)


# ---------------------------------------------------------------------------
# Parameter init (stands in for the frozen pretrained weights + LoRA init)
# ---------------------------------------------------------------------------
def init_linear_params(key, in_f, out_f):
    kw, kb = jax.random.split(key)
    bound = 1.0 / jnp.sqrt(in_f)
    w = jax.random.uniform(kw, (out_f, in_f), jnp.float32, -bound, bound)
    b = jax.random.uniform(kb, (out_f,), jnp.float32, -bound, bound)
    return w, b


def init_lora_params(key, in_f, out_f, r):
    ka, kb = jax.random.split(key)
    # matches nn.init.normal_(std=0.01) in LoRALayer.__init__
    lora_a = 0.01 * jax.random.normal(ka, (r, in_f), jnp.float32)
    lora_b = 0.01 * jax.random.normal(kb, (out_f, r), jnp.float32)
    return lora_a, lora_b


def reference_forward(params, x, alpha):
    """Pure-JAX reference mirroring the PyTorch semantics exactly."""
    def lora_lin(x, w, b, a, bl):
        orig = x @ w.T + b
        lora = (x @ a.T) @ bl.T
        return orig + lora * alpha

    h = lora_lin(x, params["w1"], params["b1"], params["lora_a1"], params["lora_b1"])
    h = jnp.maximum(h, 0.0)
    return lora_lin(h, params["w2"], params["b2"], params["lora_a2"], params["lora_b2"])


if __name__ == "__main__":
    # small shapes: batch=2, seq=8, hidden 32 -> 64 -> 32, lora_r=4, alpha=2.0
    batch, seq = 2, 8
    d_in, d_hidden, d_out = 32, 64, 32
    lora_r = 4
    lora_alpha = 2.0

    key = jax.random.PRNGKey(0)
    kx, k1, k2, k3, k4 = jax.random.split(key, 5)

    w1, b1 = init_linear_params(k1, d_in, d_hidden)
    w2, b2 = init_linear_params(k2, d_hidden, d_out)
    la1, lb1 = init_lora_params(k3, d_in, d_hidden, lora_r)
    la2, lb2 = init_lora_params(k4, d_hidden, d_out, lora_r)

    params = dict(
        w1=w1, b1=b1, lora_a1=la1, lora_b1=lb1,
        w2=w2, b2=b2, lora_a2=la2, lora_b2=lb2,
    )

    x = jax.random.normal(kx, (batch, seq, d_in), jnp.float32)
    ref = reference_forward(params, x, lora_alpha)

    # --- f32 operands: exact check; tm=8 -> grid=(2,) exercises the M tiling ---
    prep_f32 = prepare_model_params(params, lora_alpha, compute_dtype=jnp.float32)
    out_f32 = jax.block_until_ready(
        model_with_lora_forward(x, prep_f32, tm=8))
    assert out_f32.shape == (batch, seq, d_out), out_f32.shape
    assert jnp.allclose(out_f32, ref, atol=1e-4, rtol=1e-4), float(
        jnp.max(jnp.abs(out_f32 - ref)))

    # --- bf16 matmul operands / f32 accumulate+epilogue (all generations) ---
    prep_bf16 = prepare_model_params(params, lora_alpha, compute_dtype=jnp.bfloat16)
    out_bf16 = jax.block_until_ready(
        model_with_lora_forward(x, prep_bf16, tm=128))
    assert out_bf16.shape == (batch, seq, d_out), out_bf16.shape
    assert jnp.allclose(out_bf16, ref, atol=1e-1, rtol=1e-1), float(
        jnp.max(jnp.abs(out_bf16 - ref)))

    print("KERNEL_OK")
</pallas_src>

<mosaic_0001>
module attributes {stable_mosaic.version = 11 : i64} {
  func.func @_fused_lora_mlp_kernel(%arg0: i32, %arg1: memref<8x32xf32, #tpu.memory_space<vmem>>, %arg2: memref<32x72xf32, #tpu.memory_space<vmem>>, %arg3: memref<1x64xf32, #tpu.memory_space<vmem>>, %arg4: memref<8x64xf32, #tpu.memory_space<vmem>>, %arg5: memref<64x40xf32, #tpu.memory_space<vmem>>, %arg6: memref<1x32xf32, #tpu.memory_space<vmem>>, %arg7: memref<8x32xf32, #tpu.memory_space<vmem>>, %arg8: memref<8x32xf32, #tpu.memory_space<vmem>>) attributes {dimension_semantics = [#tpu.dimension_semantics<parallel>], iteration_bounds = array<i64: 2>, scalar_prefetch = 0 : i64, scratch_operands = 0 : i64, tpu.core_type = #tpu.core_type<tc>, window_params = [{transform_indices = @transform_0, window_bounds = array<i64: 8, 32>}, {pipeline_mode = #tpu.pipeline_mode<synchronous>, transform_indices = @transform_1, window_bounds = array<i64: 32, 72>}, {pipeline_mode = #tpu.pipeline_mode<synchronous>, transform_indices = @transform_2, window_bounds = array<i64: 1, 64>}, {pipeline_mode = #tpu.pipeline_mode<synchronous>, transform_indices = @transform_3, window_bounds = array<i64: 8, 64>}, {pipeline_mode = #tpu.pipeline_mode<synchronous>, transform_indices = @transform_4, window_bounds = array<i64: 64, 40>}, {pipeline_mode = #tpu.pipeline_mode<synchronous>, transform_indices = @transform_5, window_bounds = array<i64: 1, 32>}, {pipeline_mode = #tpu.pipeline_mode<synchronous>, transform_indices = @transform_6, window_bounds = array<i64: 8, 32>}, {transform_indices = @transform_7, window_bounds = array<i64: 8, 32>}]} {
    %c0 = arith.constant 0 : index
    %c0_0 = arith.constant 0 : index
    %0 = vector.load %arg1[%c0, %c0_0] : memref<8x32xf32, #tpu.memory_space<vmem>>, vector<8x32xf32>
    %c0_1 = arith.constant 0 : index
    %c0_2 = arith.constant 0 : index
    %1 = vector.load %arg2[%c0_1, %c0_2] : memref<32x72xf32, #tpu.memory_space<vmem>>, vector<32x72xf32>
    %cst = arith.constant dense<0.000000e+00> : vector<8x72xf32>
    %2 = tpu.matmul %0, %1, %cst {dimension_numbers = #tpu.dot_dimension_numbers<[1], [0], [0], [1], [0, 0, 1, 1], [], []>} : vector<8x32xf32>, vector<32x72xf32>, vector<8x72xf32> -> vector<8x72xf32>
    %3 = vector.extract_strided_slice %2 {offsets = [0, 0], sizes = [8, 64], strides = [1, 1]} : vector<8x72xf32> to vector<8x64xf32>
    %4 = vector.extract_strided_slice %2 {offsets = [0, 64], sizes = [8, 8], strides = [1, 1]} : vector<8x72xf32> to vector<8x8xf32>
    %c0_3 = arith.constant 0 : index
    %c0_4 = arith.constant 0 : index
    %5 = vector.load %arg4[%c0_3, %c0_4] : memref<8x64xf32, #tpu.memory_space<vmem>>, vector<8x64xf32>
    %cst_5 = arith.constant dense<0.000000e+00> : vector<8x64xf32>
    %6 = tpu.matmul %4, %5, %cst_5 {dimension_numbers = #tpu.dot_dimension_numbers<[1], [0], [0], [1], [0, 0, 1, 1], [], []>} : vector<8x8xf32>, vector<8x64xf32>, vector<8x64xf32> -> vector<8x64xf32>
    %c0_6 = arith.constant 0 : index
    %c0_7 = arith.constant 0 : index
    %7 = vector.load %arg3[%c0_6, %c0_7] : memref<1x64xf32, #tpu.memory_space<vmem>>, vector<1x64xf32>
    %8 = vector.broadcast %7 : vector<1x64xf32> to vector<8x64xf32>
    %9 = arith.addf %3, %8 : vector<8x64xf32>
    %10 = arith.addf %9, %6 : vector<8x64xf32>
    %cst_8 = arith.constant 0.000000e+00 : f32
    %11 = vector.broadcast %cst_8 : f32 to vector<8x64xf32>
    %12 = arith.maximumf %10, %11 : vector<8x64xf32>
    %c0_9 = arith.constant 0 : index
    %c0_10 = arith.constant 0 : index
    %13 = vector.load %arg5[%c0_9, %c0_10] : memref<64x40xf32, #tpu.memory_space<vmem>>, vector<64x40xf32>
    %cst_11 = arith.constant dense<0.000000e+00> : vector<8x40xf32>
    %14 = tpu.matmul %12, %13, %cst_11 {dimension_numbers = #tpu.dot_dimension_numbers<[1], [0], [0], [1], [0, 0, 1, 1], [], []>} : vector<8x64xf32>, vector<64x40xf32>, vector<8x40xf32> -> vector<8x40xf32>
    %15 = vector.extract_strided_slice %14 {offsets = [0, 0], sizes = [8, 32], strides = [1, 1]} : vector<8x40xf32> to vector<8x32xf32>
    %16 = vector.extract_strided_slice %14 {offsets = [0, 32], sizes = [8, 8], strides = [1, 1]} : vector<8x40xf32> to vector<8x8xf32>
    %c0_12 = arith.constant 0 : index
    %c0_13 = arith.constant 0 : index
    %17 = vector.load %arg7[%c0_12, %c0_13] : memref<8x32xf32, #tpu.memory_space<vmem>>, vector<8x32xf32>
    %cst_14 = arith.constant dense<0.000000e+00> : vector<8x32xf32>
    %18 = tpu.matmul %16, %17, %cst_14 {dimension_numbers = #tpu.dot_dimension_numbers<[1], [0], [0], [1], [0, 0, 1, 1], [], []>} : vector<8x8xf32>, vector<8x32xf32>, vector<8x32xf32> -> vector<8x32xf32>
    %c0_15 = arith.constant 0 : index
    %c0_16 = arith.constant 0 : index
    %19 = vector.load %arg6[%c0_15, %c0_16] : memref<1x32xf32, #tpu.memory_space<vmem>>, vector<1x32xf32>
    %20 = vector.broadcast %19 : vector<1x32xf32> to vector<8x32xf32>
    %21 = arith.addf %15, %20 : vector<8x32xf32>
    %22 = arith.addf %21, %18 : vector<8x32xf32>
    %c0_17 = arith.constant 0 : index
    %c0_18 = arith.constant 0 : index
    %23 = vector.load %arg8[%c0_17, %c0_18] : memref<8x32xf32, #tpu.memory_space<vmem>>, vector<8x32xf32>
    tpu.vector_store %arg8[%c0_17, %c0_18], %22 {strides = array<i32>} : memref<8x32xf32, #tpu.memory_space<vmem>>, vector<8x32xf32>,
    return
  }
  func.func @transform_0(%arg0: i32) -> (i32, i32) {
    %c0_i32 = arith.constant 0 : i32
    %c0_i32_0 = arith.constant 0 : i32
    return %arg0, %c0_i32 : i32, i32
  }
  func.func @transform_1(%arg0: i32) -> (i32, i32) {
    %c0_i32 = arith.constant 0 : i32
    %c0_i32_0 = arith.constant 0 : i32
    %c0_i32_1 = arith.constant 0 : i32
    return %c0_i32, %c0_i32_0 : i32, i32
  }
  func.func @transform_2(%arg0: i32) -> (i32, i32) {
    %c0_i32 = arith.constant 0 : i32
    %c0_i32_0 = arith.constant 0 : i32
    %c0_i32_1 = arith.constant 0 : i32
    return %c0_i32, %c0_i32_0 : i32, i32
  }
  func.func @transform_3(%arg0: i32) -> (i32, i32) {
    %c0_i32 = arith.constant 0 : i32
    %c0_i32_0 = arith.constant 0 : i32
    %c0_i32_1 = arith.constant 0 : i32
    return %c0_i32, %c0_i32_0 : i32, i32
  }
  func.func @transform_4(%arg0: i32) -> (i32, i32) {
    %c0_i32 = arith.constant 0 : i32
    %c0_i32_0 = arith.constant 0 : i32
    %c0_i32_1 = arith.constant 0 : i32
    return %c0_i32, %c0_i32_0 : i32, i32
  }
  func.func @transform_5(%arg0: i32) -> (i32, i32) {
    %c0_i32 = arith.constant 0 : i32
    %c0_i32_0 = arith.constant 0 : i32
    %c0_i32_1 = arith.constant 0 : i32
    return %c0_i32, %c0_i32_0 : i32, i32
  }
  func.func @transform_6(%arg0: i32) -> (i32, i32) {
    %c0_i32 = arith.constant 0 : i32
    %c0_i32_0 = arith.constant 0 : i32
    %c0_i32_1 = arith.constant 0 : i32
    return %c0_i32, %c0_i32_0 : i32, i32
  }
  func.func @transform_7(%arg0: i32) -> (i32, i32) {
    %c0_i32 = arith.constant 0 : i32
    %c0_i32_0 = arith.constant 0 : i32
    return %arg0, %c0_i32 : i32, i32
  }
}

</mosaic_0001>

<llo_original>
// kernel: tpu_custom_call.1
$region0: #{tpu_custom_call.1}
  #allocation0 [shape = 'u32[]', space=smem, size = 0x4, offset = 0x4, fixed_abs, tag = 'smem constant byte address 0x4 - core index']
  #allocation1 [shape = 'u32[144,128]{1,0:T(1,128)}', space=vmem, size = 0x12000, scoped, tag = 'internal scratch']
  %s0 = inlined_call_operand.vmem [shape: f32[16,32], index: 0, kind: input, shape index: {}]
  %s1 = inlined_call_operand.vmem [shape: f32[32,72], index: 1, kind: input, shape index: {}]
  %s2 = inlined_call_operand.vmem [shape: f32[1,64], index: 2, kind: input, shape index: {}]
  %s3 = inlined_call_operand.vmem [shape: f32[8,64], index: 3, kind: input, shape index: {}]
  %s4 = inlined_call_operand.vmem [shape: f32[64,40], index: 4, kind: input, shape index: {}]
  %s5 = inlined_call_operand.vmem [shape: f32[1,32], index: 5, kind: input, shape index: {}]
  %s6 = inlined_call_operand.vmem [shape: f32[8,32], index: 6, kind: input, shape index: {}]
  %s7 = inlined_call_operand.hbm [shape: f32[16,32], index: 7, kind: output, shape index: {}]
  %s8 = sld [smem:[#allocation0]]
  $region61: #{tpu_custom_call.1} parent=0
    _
  %s10 = ssub.s32 1, %s8
  %s11 = scalar_select 0, %s10, %s8
  $region1: #{tpu_custom_call.1} parent=0
    #allocation2 [shape = 'u8[8192]{0}', space=vmem, size = 0x2000, scoped, tag = 'output window, operand 0']
    #allocation3 [shape = 's32[2]{0}', space=sflag, size = 0x8, scoped, tag = 'scoped memory for tpu_custom_call.1']
    %12 = vsyncpa [#allocation3], 0
    %s13 = scalar_lea.sflag [#allocation3], 1
    %14 = vsyncpa %s13, 0
    loop: start=0, step=1, limit=4
    $region2: #{tpu_custom_call.1} parent=1 // loop_pre_header
      _
    $region3: #{tpu_custom_call.1} parent=1 // loop_header
      %s16 = sphi 0, %s20
      %p17 = scmp.ge.s32.totalorder %s16, 4
      %s26 = sphi 0, %s28
      %s29 = sphi 0, %s26
      %s30 = sphi 0, %s29
      %s46 = sphi 0, %s30
      %s50 = sphi 0, %s50
      %s52 = sphi 0, %s50
      %s53 = sphi 0, %s52
      %s67 = sphi 0, %s53
      %s71 = sphi 0, %s71
      %s73 = sphi 0, %s71
      %s74 = sphi 0, %s73
      %s88 = sphi 0, %s74
      %s92 = sphi 0, %s92
      %s94 = sphi 0, %s92
      %s95 = sphi 0, %s94
      %s109 = sphi 0, %s95
      %s113 = sphi 0, %s113
      %s115 = sphi 0, %s113
      %s116 = sphi 0, %s115
      %s130 = sphi 0, %s116
      %s134 = sphi 0, %s134
      %s136 = sphi 0, %s134
      %s137 = sphi 0, %s136
      %s151 = sphi 0, %s137
      %s155 = sphi 0, %s155
      %s157 = sphi 0, %s155
      %s158 = sphi 0, %s157
      %s172 = sphi 0, %s158
      %s178 = sphi 0, %s180
      %s181 = sphi 0, %s178
      %s182 = sphi 0, %s181
      %s198 = sphi 0, %s182
    $region4: #{tpu_custom_call.1} parent=1 // loop_header_branch
      %19 = sbr.rel (%p17) target = $region8
    $region5: #{tpu_custom_call.1} parent=1 // loop_body
      %s21 = ssub.s32 %s16, 1
      %s22 = ssub.s32 %s16, 2
      %s23 = sadd.s32 %s16, 1
      %s24 = ssub.s32 %s16, %s23
      %p25 = scmp.eq.s32.totalorder %s24, 0
      %s27 = sadd.s32 %s26, 1
      %s28 = scalar_select %p25, %s26, %s27
      %p31 = pneg %p25
      %p32 = scmp.eq.s32.totalorder %s16, 1
      %p33 = por %p31, %p32
      %p34 = scmp.ne.s32.totalorder %s26, %s29
      %p35 = scmp.eq.s32.totalorder %s16, 0
      %p36 = por %p34, %p35
      %p37 = scmp.ne.s32.totalorder %s26, %s29
      %p38 = scmp.eq.s32.totalorder %s21, 1
      %p39 = por %p37, %p38
      %p40 = scmp.ne.s32.totalorder %s29, %s30
      %p41 = scmp.eq.s32.totalorder %s21, 0
      %p42 = por %p40, %p41
      %p43 = scmp.ne.s32.totalorder %s29, %s30
      %p44 = scmp.eq.s32.totalorder %s22, 1
      %p45 = por %p43, %p44
      %p47 = scmp.ne.s32.totalorder %s30, %s46
      %p48 = scmp.eq.s32.totalorder %s22, 0
      %p49 = por %p47, %p48
      %s51 = sadd.s32 %s50, 1
      %p54 = scmp.eq.s32.totalorder %s16, 1
      %p55 = scmp.ne.s32.totalorder %s50, %s52
      %p56 = scmp.eq.s32.totalorder %s16, 0
      %p57 = por %p55, %p56
      %p58 = scmp.ne.s32.totalorder %s50, %s52
      %p59 = scmp.eq.s32.totalorder %s21, 1
      %p60 = por %p58, %p59
      %p61 = scmp.ne.s32.totalorder %s52, %s53
      %p62 = scmp.eq.s32.totalorder %s21, 0
      %p63 = por %p61, %p62
      %p64 = scmp.ne.s32.totalorder %s52, %s53
      %p65 = scmp.eq.s32.totalorder %s22, 1
      %p66 = por %p64, %p65
      %p68 = scmp.ne.s32.totalorder %s53, %s67
      %p69 = scmp.eq.s32.totalorder %s22, 0
      %p70 = por %p68, %p69
      %s72 = sadd.s32 %s71, 1
      %p75 = scmp.eq.s32.totalorder %s16, 1
      %p76 = scmp.ne.s32.totalorder %s71, %s73
      %p77 = scmp.eq.s32.totalorder %s16, 0
      %p78 = por %p76, %p77
      %p79 = scmp.ne.s32.totalorder %s71, %s73
      %p80 = scmp.eq.s32.totalorder %s21, 1
      %p81 = por %p79, %p80
      %p82 = scmp.ne.s32.totalorder %s73, %s74
      %p83 = scmp.eq.s32.totalorder %s21, 0
      %p84 = por %p82, %p83
      %p85 = scmp.ne.s32.totalorder %s73, %s74
      %p86 = scmp.eq.s32.totalorder %s22, 1
      %p87 = por %p85, %p86
      %p89 = scmp.ne.s32.totalorder %s74, %s88
      %p90 = scmp.eq.s32.totalorder %s22, 0
      %p91 = por %p89, %p90
      %s93 = sadd.s32 %s92, 1
      %p96 = scmp.eq.s32.totalorder %s16, 1
      %p97 = scmp.ne.s32.totalorder %s92, %s94
      %p98 = scmp.eq.s32.totalorder %s16, 0
      %p99 = por %p97, %p98
      %p100 = scmp.ne.s32.totalorder %s92, %s94
      %p101 = scmp.eq.s32.totalorder %s21, 1
      %p102 = por %p100, %p101
      %p103 = scmp.ne.s32.totalorder %s94, %s95
      %p104 = scmp.eq.s32.totalorder %s21, 0
      %p105 = por %p103, %p104
      %p106 = scmp.ne.s32.totalorder %s94, %s95
      %p107 = scmp.eq.s32.totalorder %s22, 1
      %p108 = por %p106, %p107
      %p110 = scmp.ne.s32.totalorder %s95, %s109
      %p111 = scmp.eq.s32.totalorder %s22, 0
      %p112 = por %p110, %p111
      %s114 = sadd.s32 %s113, 1
      %p117 = scmp.eq.s32.totalorder %s16, 1
      %p118 = scmp.ne.s32.totalorder %s113, %s115
      %p119 = scmp.eq.s32.totalorder %s16, 0
      %p120 = por %p118, %p119
      %p121 = scmp.ne.s32.totalorder %s113, %s115
      %p122 = scmp.eq.s32.totalorder %s21, 1
      %p123 = por %p121, %p122
      %p124 = scmp.ne.s32.totalorder %s115, %s116
      %p125 = scmp.eq.s32.totalorder %s21, 0
      %p126 = por %p124, %p125
      %p127 = scmp.ne.s32.totalorder %s115, %s116
      %p128 = scmp.eq.s32.totalorder %s22, 1
      %p129 = por %p127, %p128
      %p131 = scmp.ne.s32.totalorder %s116, %s130
      %p132 = scmp.eq.s32.totalorder %s22, 0
      %p133 = por %p131, %p132
      %s135 = sadd.s32 %s134, 1
      %p138 = scmp.eq.s32.totalorder %s16, 1
      %p139 = scmp.ne.s32.totalorder %s134, %s136
      %p140 = scmp.eq.s32.totalorder %s16, 0
      %p141 = por %p139, %p140
      %p142 = scmp.ne.s32.totalorder %s134, %s136
      %p143 = scmp.eq.s32.totalorder %s21, 1
      %p144 = por %p142, %p143
      %p145 = scmp.ne.s32.totalorder %s136, %s137
      %p146 = scmp.eq.s32.totalorder %s21, 0
      %p147 = por %p145, %p146
      %p148 = scmp.ne.s32.totalorder %s136, %s137
      %p149 = scmp.eq.s32.totalorder %s22, 1
      %p150 = por %p148, %p149
      %p152 = scmp.ne.s32.totalorder %s137, %s151
      %p153 = scmp.eq.s32.totalorder %s22, 0
      %p154 = por %p152, %p153
      %s156 = sadd.s32 %s155, 1
      %p159 = scmp.eq.s32.totalorder %s16, 1
      %p160 = scmp.ne.s32.totalorder %s155, %s157
      %p161 = scmp.eq.s32.totalorder %s16, 0
      %p162 = por %p160, %p161
      %p163 = scmp.ne.s32.totalorder %s155, %s157
      %p164 = scmp.eq.s32.totalorder %s21, 1
      %p165 = por %p163, %p164
      %p166 = scmp.ne.s32.totalorder %s157, %s158
      %p167 = scmp.eq.s32.totalorder %s21, 0
      %p168 = por %p166, %p167
      %p169 = scmp.ne.s32.totalorder %s157, %s158
      %p170 = scmp.eq.s32.totalorder %s22, 1
      %p171 = por %p169, %p170
      %p173 = scmp.ne.s32.totalorder %s158, %s172
      %p174 = scmp.eq.s32.totalorder %s22, 0
      %p175 = por %p173, %p174
      %s176 = ssub.s32 %s16, %s23
      %p177 = scmp.eq.s32.totalorder %s176, 0
      %s179 = sadd.s32 %s178, 1
      %s180 = scalar_select %p177, %s178, %s179
      %p183 = pneg %p177
      %p184 = scmp.eq.s32.totalorder %s16, 1
      %p185 = por %p183, %p184
      %p186 = scmp.ne.s32.totalorder %s178, %s181
      %p187 = scmp.eq.s32.totalorder %s16, 0
      %p188 = por %p186, %p187
      %p189 = scmp.ne.s32.totalorder %s178, %s181
      %p190 = scmp.eq.s32.totalorder %s21, 1
      %p191 = por %p189, %p190
      %p192 = scmp.ne.s32.totalorder %s181, %s182
      %p193 = scmp.eq.s32.totalorder %s21, 0
      %p194 = por %p192, %p193
      %p195 = scmp.ne.s32.totalorder %s181, %s182
      %p196 = scmp.eq.s32.totalorder %s22, 1
      %p197 = por %p195, %p196
      %p199 = scmp.ne.s32.totalorder %s182, %s198
      %p200 = scmp.eq.s32.totalorder %s22, 0
      %p201 = por %p199, %p200
      %p202 = scmp.le.s32.totalorder 1, %s16
      %p203 = scmp.lt.s32.totalorder %s16, 3
      %p204 = pnand %p202, %p203
      %p205 = pneg %p204
      // Predicated region
      $region9: #{tpu_custom_call.1} parent=5 // pred_check
        _
      $region10: #{tpu_custom_call.1} parent=5 // pred_check_branch
        %207 = sbr.rel (%p204) target = $region12
      $region11: #{tpu_custom_call.1} parent=5 // pred_region
        %s208 = ssub.s32 %s16, 1
        // Predicated region
        $region13: #{tpu_custom_call.1} parent=11 // pred_check
          %p209 = pneg %p63
        $region14: #{tpu_custom_call.1} parent=11 // pred_check_branch
          %211 = sbr.rel (%p209) target = $region16
        $region15: #{tpu_custom_call.1} parent=11 // pred_region
          _
        $region16: #{tpu_custom_call.1} parent=11 // pred_fallthru
          _
        // Predicated region
        $region17: #{tpu_custom_call.1} parent=11 // pred_check
          %p212 = pneg %p84
        $region18: #{tpu_custom_call.1} parent=11 // pred_check_branch
          %214 = sbr.rel (%p212) target = $region20
        $region19: #{tpu_custom_call.1} parent=11 // pred_region
          _
        $region20: #{tpu_custom_call.1} parent=11 // pred_fallthru
          _
        // Predicated region
        $region21: #{tpu_custom_call.1} parent=11 // pred_check
          %p215 = pneg %p105
        $region22: #{tpu_custom_call.1} parent=11 // pred_check_branch
          %217 = sbr.rel (%p215) target = $region24
        $region23: #{tpu_custom_call.1} parent=11 // pred_region
          _
        $region24: #{tpu_custom_call.1} parent=11 // pred_fallthru
          _
        // Predicated region
        $region25: #{tpu_custom_call.1} parent=11 // pred_check
          %p218 = pneg %p126
        $region26: #{tpu_custom_call.1} parent=11 // pred_check_branch
          %220 = sbr.rel (%p218) target = $region28
        $region27: #{tpu_custom_call.1} parent=11 // pred_region
          _
        $region28: #{tpu_custom_call.1} parent=11 // pred_fallthru
          _
        // Predicated region
        $region29: #{tpu_custom_call.1} parent=11 // pred_check
          %p221 = pneg %p147
        $region30: #{tpu_custom_call.1} parent=11 // pred_check_branch
          %223 = sbr.rel (%p221) target = $region32
        $region31: #{tpu_custom_call.1} parent=11 // pred_region
          _
        $region32: #{tpu_custom_call.1} parent=11 // pred_fallthru
          _
        // Predicated region
        $region33: #{tpu_custom_call.1} parent=11 // pred_check
          %p224 = pneg %p168
        $region34: #{tpu_custom_call.1} parent=11 // pred_check_branch
          %226 = sbr.rel (%p224) target = $region36
        $region35: #{tpu_custom_call.1} parent=11 // pred_region
          _
        $region36: #{tpu_custom_call.1} parent=11 // pred_fallthru
          _
      $region12: #{tpu_custom_call.1} parent=5 // pred_fallthru
        _
      %p227 = scmp.lt.s32.totalorder %s16, 2
      // Predicated region
      $region37: #{tpu_custom_call.1} parent=5 // pred_check
        %p228 = pneg %p227
      $region38: #{tpu_custom_call.1} parent=5 // pred_check_branch
        %230 = sbr.rel (%p228) target = $region40
      $region39: #{tpu_custom_call.1} parent=5 // pred_region
        // Predicated region
        $region41: #{tpu_custom_call.1} parent=39 // pred_check
          %p231 = pneg %p36
        $region42: #{tpu_custom_call.1} parent=39 // pred_check_branch
          %233 = sbr.rel (%p231) target = $region44
        $region43: #{tpu_custom_call.1} parent=39 // pred_region
          %p234 = scmp.lt.s32.totalorder %s16, 1
          %s235 = scalar_select %p234, %s16, 1
          %s236 = smul.addr %s235, 8
          %s237 = scalar_lea.vmem %s0, %s236
        $region44: #{tpu_custom_call.1} parent=39 // pred_fallthru
          _
      $region40: #{tpu_custom_call.1} parent=5 // pred_fallthru
        _
      %p238 = scmp.le.s32.totalorder 1, %s16
      %p239 = scmp.lt.s32.totalorder %s16, 3
      %p240 = pnand %p238, %p239
      %p241 = pneg %p240
      // Predicated region
      $region45: #{tpu_custom_call.1} parent=5 // pred_check
        _
      $region46: #{tpu_custom_call.1} parent=5 // pred_check_branch
        %243 = sbr.rel (%p240) target = $region48
      $region47: #{tpu_custom_call.1} parent=5 // pred_region
        %s244 = ssub.s32 %s16, 1
        %p245 = scmp.lt.s32.totalorder %s21, 1
        %s246 = scalar_select %p245, %s21, 1
        %s247 = smul.addr %s246, 8
        %s248 = scalar_lea.vmem %s0, %s247
        %p249 = pneg %p42
        %p250 = pneg %p39
        %p251 = pneg %p63
        %p252 = pneg %p60
        %p253 = pneg %p84
        %p254 = pneg %p81
        %p255 = pneg %p105
        %p256 = pneg %p102
        %p257 = pneg %p126
        %p258 = pneg %p123
        %p259 = pneg %p147
        %p260 = pneg %p144
        %p261 = pneg %p168
        %p262 = pneg %p165
        %p263 = pneg %p194
        %p264 = pneg %p191
        %s265 = sand.u32 %s181, 1
        %s266 = scalar_lea.sflag [#allocation3], %s265
        %s267 = sand.u32 %s181, 1
        %s268 = smul.addr %s267, 8
        %s269 = scalar_lea.vmem [#allocation2], %s268
        %p270 = scmp.lt.s32.totalorder %s21, 1
        %s271 = scalar_select %p270, %s21, 1
        %s272 = smul.addr %s271, 8
        %s273 = scalar_lea.vmem %s0, %s272
        %v274 = vld [vmem:[%s273] sm:$0xff]
        %v275 = vld [vmem:[%s1] sm:$0xff]
        %v276 = vld [vmem:[%s1 + $0x8] sm:$0xff]
        %v277 = vld [vmem:[%s1 + $0x10] sm:$0xff]
        %v278 = vld [vmem:[%s1 + $0x18] sm:$0xff]
        %vm279 = vcmask 261120
        %v281 = vsel %vm279, %v274, 0
        %283 = vmatprep.subr.mxu0 0.0
        %284 = vmatpush1.msra.mxu0 %v275
        %285 = vmatprep.subr.mxu0 0.0
        %286 = vmatpush1.msra.mxu0 %v276
        %287 = vmatprep.subr.mxu0 0.0
        %288 = vmatpush1.msra.mxu0 %v277
        %289 = vmatprep.subr.mxu0 0.0
        %290 = vmatpush1.msra.mxu0 %v278
        %291 = vmatprep.subr.mxu0 0.0
        %292 = vmatpush1.msra.mxu0 0.0
        %293 = vmatprep.subr.mxu0 0.0
        %294 = vmatpush1.msra.mxu0 0.0
        %295 = vmatprep.subr.mxu0 0.0
        %296 = vmatpush1.msra.mxu0 0.0
        %297 = vmatprep.subr.mxu0 0.0
        %298 = vmatpush1.msra.mxu0 0.0
        %299 = vmatprep.subr.mxu0 0.0
        %300 = vmatpush1.msra.mxu0 0.0
        %301 = vmatprep.subr.mxu0 0.0
        %302 = vmatpush1.msra.mxu0 0.0
        %303 = vmatprep.subr.mxu0 0.0
        %304 = vmatpush1.msra.mxu0 0.0
        %305 = vmatprep.subr.mxu0 0.0
        %306 = vmatpush1.msra.mxu0 0.0
        %307 = vmatprep.subr.mxu0 0.0
        %308 = vmatpush1.msra.mxu0 0.0
        %309 = vmatprep.subr.mxu0 0.0
        %310 = vmatpush1.msra.mxu0 0.0
        %311 = vmatprep.subr.mxu0 0.0
        %312 = vmatpush1.msra.mxu0 0.0
        %313 = vmatprep.subr.mxu0 0.0
        %314 = vmatpush1.msra.mxu0 0.0
        %315 = vmatprep.subr.mxu0 0.0
        %316 = vmatpush1.msra.mxu0 0.0
        %317 = vmatprep.subr.mxu0 0.0
        %318 = vmatpush1.msra.mxu0 0.0
        %319 = vmatprep.subr.mxu0 0.0
        %320 = vmatpush1.msra.mxu0 0.0
        %321 = vmatprep.subr.mxu0 0.0
        %322 = vmatpush1.msra.mxu0 0.0
        %323 = vmatprep.subr.mxu0 0.0
        %324 = vmatpush1.msra.mxu0 0.0
        %325 = vmatprep.subr.mxu0 0.0
        %326 = vmatpush1.msra.mxu0 0.0
        %327 = vmatprep.subr.mxu0 0.0
        %328 = vmatpush1.msra.mxu0 0.0
        %329 = vmatprep.subr.mxu0 0.0
        %330 = vmatpush1.msra.mxu0 0.0
        %331 = vmatprep.subr.mxu0 0.0
        %332 = vmatpush1.msra.mxu0 0.0
        %333 = vmatprep.subr.mxu0 0.0
        %334 = vmatpush1.msra.mxu0 0.0
        %335 = vmatprep.subr.mxu0 0.0
        %336 = vmatpush1.msra.mxu0 0.0
        %337 = vmatprep.subr.mxu0 0.0
        %338 = vmatpush1.msra.mxu0 0.0
        %339 = vmatprep.subr.mxu0 0.0
        %340 = vmatpush1.msra.mxu0 0.0
        %341 = vmatprep.subr.mxu0 0.0
        %342 = vmatpush1.msra.mxu0 0.0
        %343 = vmatprep.subr.mxu0 0.0
        %344 = vmatpush1.msra.mxu0 0.0
        %345 = vmatprep.subr.mxu0 0.0
        %346 = vmatpush1.msra.mxu0 0.0
        %347 = vmatprep.mubr.f32.mxu0 0.0
        %348 = vmatmul.mubr.f32.gmra.mrb[0].mxu0 %v281
        %v349 = vpop.f32.mrb[0].mxu0
        %v350 = vadd.f32 0.0, %v349
        %v351 = vpop.f32.mrb[0].mxu0
        %352 = vdwg.mxu0
        %v353 = vld [vmem:[%s3] sm:$0xff]
        %355 = vrot.lane.b32.xlu0 %v350, 64
        %v356 = vpop.permute.xlu0 %355
        %vm357 = vcmask 64512
        %v358 = vsel %vm357, %v356, 0
        %360 = vmatprep.subr.mxu0 0.0
        %361 = vmatpush1.msra.mxu0 %v353
        %362 = vmatprep.subr.mxu0 0.0
        %363 = vmatpush1.msra.mxu0 0.0
        %364 = vmatprep.subr.mxu0 0.0
        %365 = vmatpush1.msra.mxu0 0.0
        %366 = vmatprep.subr.mxu0 0.0
        %367 = vmatpush1.msra.mxu0 0.0
        %368 = vmatprep.subr.mxu0 0.0
        %369 = vmatpush1.msra.mxu0 0.0
        %370 = vmatprep.subr.mxu0 0.0
        %371 = vmatpush1.msra.mxu0 0.0
        %372 = vmatprep.subr.mxu0 0.0
        %373 = vmatpush1.msra.mxu0 0.0
        %374 = vmatprep.subr.mxu0 0.0
        %375 = vmatpush1.msra.mxu0 0.0
        %376 = vmatprep.subr.mxu0 0.0
        %377 = vmatpush1.msra.mxu0 0.0
        %378 = vmatprep.subr.mxu0 0.0
        %379 = vmatpush1.msra.mxu0 0.0
        %380 = vmatprep.subr.mxu0 0.0
        %381 = vmatpush1.msra.mxu0 0.0
        %382 = vmatprep.subr.mxu0 0.0
        %383 = vmatpush1.msra.mxu0 0.0
        %384 = vmatprep.subr.mxu0 0.0
        %385 = vmatpush1.msra.mxu0 0.0
        %386 = vmatprep.subr.mxu0 0.0
        %387 = vmatpush1.msra.mxu0 0.0
        %388 = vmatprep.subr.mxu0 0.0
        %389 = vmatpush1.msra.mxu0 0.0
        %390 = vmatprep.subr.mxu0 0.0
        %391 = vmatpush1.msra.mxu0 0.0
        %392 = vmatprep.subr.mxu0 0.0
        %393 = vmatpush1.msra.mxu0 0.0
        %394 = vmatprep.subr.mxu0 0.0
        %395 = vmatpush1.msra.mxu0 0.0
        %396 = vmatprep.subr.mxu0 0.0
        %397 = vmatpush1.msra.mxu0 0.0
        %398 = vmatprep.subr.mxu0 0.0
        %399 = vmatpush1.msra.mxu0 0.0
        %400 = vmatprep.subr.mxu0 0.0
        %401 = vmatpush1.msra.mxu0 0.0
        %402 = vmatprep.subr.mxu0 0.0
        %403 = vmatpush1.msra.mxu0 0.0
        %404 = vmatprep.subr.mxu0 0.0
        %405 = vmatpush1.msra.mxu0 0.0
        %406 = vmatprep.subr.mxu0 0.0
        %407 = vmatpush1.msra.mxu0 0.0
        %408 = vmatprep.subr.mxu0 0.0
        %409 = vmatpush1.msra.mxu0 0.0
        %410 = vmatprep.subr.mxu0 0.0
        %411 = vmatpush1.msra.mxu0 0.0
        %412 = vmatprep.subr.mxu0 0.0
        %413 = vmatpush1.msra.mxu0 0.0
        %414 = vmatprep.subr.mxu0 0.0
        %415 = vmatpush1.msra.mxu0 0.0
        %416 = vmatprep.subr.mxu0 0.0
        %417 = vmatpush1.msra.mxu0 0.0
        %418 = vmatprep.subr.mxu0 0.0
        %419 = vmatpush1.msra.mxu0 0.0
        %420 = vmatprep.subr.mxu0 0.0
        %421 = vmatpush1.msra.mxu0 0.0
        %422 = vmatprep.subr.mxu0 0.0
        %423 = vmatpush1.msra.mxu0 0.0
        %424 = vmatprep.mubr.f32.mxu0 0.0
        %425 = vmatmul.mubr.f32.gmra.mrb[0].mxu0 %v358
        %v426 = vpop.f32.mrb[0].mxu0
        %v427 = vadd.f32 0.0, %v426
        %v428 = vpop.f32.mrb[0].mxu0
        %429 = vdwg.mxu0
        %v430 = vld [vmem:[%s2] sm:$0x1]
        %v432 = vlaneseq
        %v433 = vshrl.u32 %v432, 7
        %v434 = vsub.s32 0, %v433
        %v435 = vrot.slane %v430, %v434
        %v437 = vadd.f32 %v350, %v435
        %v438 = vadd.f32 %v437, %v427
        %v439 = vmax.f32 %v438, 0.0
        %v440 = vld [vmem:[%s4] sm:$0xff]
        %v441 = vld [vmem:[%s4 + $0x8] sm:$0xff]
        %v442 = vld [vmem:[%s4 + $0x10] sm:$0xff]
        %v443 = vld [vmem:[%s4 + $0x18] sm:$0xff]
        %v444 = vld [vmem:[%s4 + $0x20] sm:$0xff]
        %v445 = vld [vmem:[%s4 + $0x28] sm:$0xff]
        %v446 = vld [vmem:[%s4 + $0x30] sm:$0xff]
        %v447 = vld [vmem:[%s4 + $0x38] sm:$0xff]
        %vm448 = vcmask 523264
        %v450 = vsel %vm448, %v439, 0
        %452 = vmatprep.subr.mxu0 0.0
        %453 = vmatpush1.msra.mxu0 %v440
        %454 = vmatprep.subr.mxu0 0.0
        %455 = vmatpush1.msra.mxu0 %v441
        %456 = vmatprep.subr.mxu0 0.0
        %457 = vmatpush1.msra.mxu0 %v442
        %458 = vmatprep.subr.mxu0 0.0
        %459 = vmatpush1.msra.mxu0 %v443
        %460 = vmatprep.subr.mxu0 0.0
        %461 = vmatpush1.msra.mxu0 %v444
        %462 = vmatprep.subr.mxu0 0.0
        %463 = vmatpush1.msra.mxu0 %v445
        %464 = vmatprep.subr.mxu0 0.0
        %465 = vmatpush1.msra.mxu0 %v446
        %466 = vmatprep.subr.mxu0 0.0
        %467 = vmatpush1.msra.mxu0 %v447
        %468 = vmatprep.subr.mxu0 0.0
        %469 = vmatpush1.msra.mxu0 0.0
        %470 = vmatprep.subr.mxu0 0.0
        %471 = vmatpush1.msra.mxu0 0.0
        %472 = vmatprep.subr.mxu0 0.0
        %473 = vmatpush1.msra.mxu0 0.0
        %474 = vmatprep.subr.mxu0 0.0
        %475 = vmatpush1.msra.mxu0 0.0
        %476 = vmatprep.subr.mxu0 0.0
        %477 = vmatpush1.msra.mxu0 0.0
        %478 = vmatprep.subr.mxu0 0.0
        %479 = vmatpush1.msra.mxu0 0.0
        %480 = vmatprep.subr.mxu0 0.0
        %481 = vmatpush1.msra.mxu0 0.0
        %482 = vmatprep.subr.mxu0 0.0
        %483 = vmatpush1.msra.mxu0 0.0
        %484 = vmatprep.subr.mxu0 0.0
        %485 = vmatpush1.msra.mxu0 0.0
        %486 = vmatprep.subr.mxu0 0.0
        %487 = vmatpush1.msra.mxu0 0.0
        %488 = vmatprep.subr.mxu0 0.0
        %489 = vmatpush1.msra.mxu0 0.0
        %490 = vmatprep.subr.mxu0 0.0
        %491 = vmatpush1.msra.mxu0 0.0
        %492 = vmatprep.subr.mxu0 0.0
        %493 = vmatpush1.msra.mxu0 0.0
        %494 = vmatprep.subr.mxu0 0.0
        %495 = vmatpush1.msra.mxu0 0.0
        %496 = vmatprep.subr.mxu0 0.0
        %497 = vmatpush1.msra.mxu0 0.0
        %498 = vmatprep.subr.mxu0 0.0
        %499 = vmatpush1.msra.mxu0 0.0
        %500 = vmatprep.subr.mxu0 0.0
        %501 = vmatpush1.msra.mxu0 0.0
        %502 = vmatprep.subr.mxu0 0.0
        %503 = vmatpush1.msra.mxu0 0.0
        %504 = vmatprep.subr.mxu0 0.0
        %505 = vmatpush1.msra.mxu0 0.0
        %506 = vmatprep.subr.mxu0 0.0
        %507 = vmatpush1.msra.mxu0 0.0
        %508 = vmatprep.subr.mxu0 0.0
        %509 = vmatpush1.msra.mxu0 0.0
        %510 = vmatprep.subr.mxu0 0.0
        %511 = vmatpush1.msra.mxu0 0.0
        %512 = vmatprep.subr.mxu0 0.0
        %513 = vmatpush1.msra.mxu0 0.0
        %514 = vmatprep.subr.mxu0 0.0
        %515 = vmatpush1.msra.mxu0 0.0
        %516 = vmatprep.mubr.f32.mxu0 0.0
        %517 = vmatmul.mubr.f32.gmra.mrb[0].mxu0 %v450
        %v518 = vpop.f32.mrb[0].mxu0
        %v519 = vadd.f32 0.0, %v518
        %v520 = vpop.f32.mrb[0].mxu0
        %521 = vdwg.mxu0
        %v522 = vld [vmem:[%s6] sm:$0xff]
        %524 = vrot.lane.b32.xlu0 %v519, 96
        %v525 = vpop.permute.xlu0 %524
        %v526 = vsel %vm357, %v525, 0
        %528 = vmatprep.subr.mxu0 0.0
        %529 = vmatpush1.msra.mxu0 %v522
        %530 = vmatprep.subr.mxu0 0.0
        %531 = vmatpush1.msra.mxu0 0.0
        %532 = vmatprep.subr.mxu0 0.0
        %533 = vmatpush1.msra.mxu0 0.0
        %534 = vmatprep.subr.mxu0 0.0
        %535 = vmatpush1.msra.mxu0 0.0
        %536 = vmatprep.subr.mxu0 0.0
        %537 = vmatpush1.msra.mxu0 0.0
        %538 = vmatprep.subr.mxu0 0.0
        %539 = vmatpush1.msra.mxu0 0.0
        %540 = vmatprep.subr.mxu0 0.0
        %541 = vmatpush1.msra.mxu0 0.0
        %542 = vmatprep.subr.mxu0 0.0
        %543 = vmatpush1.msra.mxu0 0.0
        %544 = vmatprep.subr.mxu0 0.0
        %545 = vmatpush1.msra.mxu0 0.0
        %546 = vmatprep.subr.mxu0 0.0
        %547 = vmatpush1.msra.mxu0 0.0
        %548 = vmatprep.subr.mxu0 0.0
        %549 = vmatpush1.msra.mxu0 0.0
        %550 = vmatprep.subr.mxu0 0.0
        %551 = vmatpush1.msra.mxu0 0.0
        %552 = vmatprep.subr.mxu0 0.0
        %553 = vmatpush1.msra.mxu0 0.0
        %554 = vmatprep.subr.mxu0 0.0
        %555 = vmatpush1.msra.mxu0 0.0
        %556 = vmatprep.subr.mxu0 0.0
        %557 = vmatpush1.msra.mxu0 0.0
        %558 = vmatprep.subr.mxu0 0.0
        %559 = vmatpush1.msra.mxu0 0.0
        %560 = vmatprep.subr.mxu0 0.0
        %561 = vmatpush1.msra.mxu0 0.0
        %562 = vmatprep.subr.mxu0 0.0
        %563 = vmatpush1.msra.mxu0 0.0
        %564 = vmatprep.subr.mxu0 0.0
        %565 = vmatpush1.msra.mxu0 0.0
        %566 = vmatprep.subr.mxu0 0.0
        %567 = vmatpush1.msra.mxu0 0.0
        %568 = vmatprep.subr.mxu0 0.0
        %569 = vmatpush1.msra.mxu0 0.0
        %570 = vmatprep.subr.mxu0 0.0
        %571 = vmatpush1.msra.mxu0 0.0
        %572 = vmatprep.subr.mxu0 0.0
        %573 = vmatpush1.msra.mxu0 0.0
        %574 = vmatprep.subr.mxu0 0.0
        %575 = vmatpush1.msra.mxu0 0.0
        %576 = vmatprep.subr.mxu0 0.0
        %577 = vmatpush1.msra.mxu0 0.0
        %578 = vmatprep.subr.mxu0 0.0
        %579 = vmatpush1.msra.mxu0 0.0
        %580 = vmatprep.subr.mxu0 0.0
        %581 = vmatpush1.msra.mxu0 0.0
        %582 = vmatprep.subr.mxu0 0.0
        %583 = vmatpush1.msra.mxu0 0.0
        %584 = vmatprep.subr.mxu0 0.0
        %585 = vmatpush1.msra.mxu0 0.0
        %586 = vmatprep.subr.mxu0 0.0
        %587 = vmatpush1.msra.mxu0 0.0
        %588 = vmatprep.subr.mxu0 0.0
        %589 = vmatpush1.msra.mxu0 0.0
        %590 = vmatprep.subr.mxu0 0.0
        %591 = vmatpush1.msra.mxu0 0.0
        %592 = vmatprep.mubr.f32.mxu0 0.0
        %593 = vmatmul.mubr.f32.gmra.mrb[0].mxu0 %v526
        %v594 = vpop.f32.mrb[0].mxu0
        %v595 = vadd.f32 0.0, %v594
        %v596 = vpop.f32.mrb[0].mxu0
        %597 = vdwg.mxu0
        %v598 = vld [vmem:[%s5] sm:$0x1]
        %v600 = vlaneseq
        %v601 = vshrl.u32 %v600, 7
        %v602 = vsub.s32 0, %v601
        %v603 = vrot.slane %v598, %v602
        %v605 = vadd.f32 %v519, %v603
        %v606 = vadd.f32 %v605, %v595
        %607 = vst.msk [vmem:[%s269] sm:$0xff] %vm279, %v606
        %s608 = sand.u32 %s181, 1
        %s609 = scalar_lea.sflag [#allocation3], %s608
        %s610 = sand.u32 %s181, 1
        %s611 = smul.addr %s610, 8
        %s612 = scalar_lea.vmem [#allocation2], %s611
        // Predicated region
        $region49: #{tpu_custom_call.1} parent=47 // pred_check
          %p613 = pneg %p191
        $region50: #{tpu_custom_call.1} parent=47 // pred_check_branch
          %615 = sbr.rel (%p613) target = $region52
        $region51: #{tpu_custom_call.1} parent=47 // pred_region
          %s617 = ssub.s32 128, 128
          %618 = vsyncadd %s609, %s617
          %s619 = smul.addr %s21, 128
          %s620 = scalar_lea.hbm %s7, %s619
          %s622 = sshll.u32 %s612, 4
          %s623 = int_to_ptr.vmem [resolvable:$true] %s622
          %625 = dma.vmem_to_hbm [thread:$0]  %s623, 128, %s620, %s609
        $region52: #{tpu_custom_call.1} parent=47 // pred_fallthru
          _
      $region48: #{tpu_custom_call.1} parent=5 // pred_fallthru
        _
      %p626 = scmp.le.s32.totalorder 2, %s16
      // Predicated region
      $region53: #{tpu_custom_call.1} parent=5 // pred_check
        %p627 = pneg %p626
      $region54: #{tpu_custom_call.1} parent=5 // pred_check_branch
        %629 = sbr.rel (%p627) target = $region56
      $region55: #{tpu_custom_call.1} parent=5 // pred_region
        %s630 = ssub.s32 %s16, 2
        // Predicated region
        $region57: #{tpu_custom_call.1} parent=55 // pred_check
          %p631 = pneg %p197
        $region58: #{tpu_custom_call.1} parent=55 // pred_check_branch
          %633 = sbr.rel (%p631) target = $region60
        $region59: #{tpu_custom_call.1} parent=55 // pred_region
          %s634 = sand.u32 %s182, 1
          %s635 = scalar_lea.sflag [#allocation3], %s634
          %s636 = sand.u32 %s182, 1
          %s637 = smul.addr %s636, 8
          %s638 = scalar_lea.vmem [#allocation2], %s637
          %639 = dma.done %s635, 128
        $region60: #{tpu_custom_call.1} parent=55 // pred_fallthru
          _
      $region56: #{tpu_custom_call.1} parent=5 // pred_fallthru
        _
    $region6: #{tpu_custom_call.1} parent=1 // loop_footer
      %s20 = sadd.s32 1, %s16
    $region7: #{tpu_custom_call.1} parent=1 // loop_footer_branch
      %15 = sbr.rel target = $region3
    $region8: #{tpu_custom_call.1} parent=1 // loop_exit
      _
    %640 = vsyncpa [#allocation3], 1
    %s641 = scalar_lea.sflag [#allocation3], 1
    %642 = vsyncpa %s641, 1

</llo_original>
